<compile_context>
chip_gen: v5e
topology: v5e:2x2
jax: 0.10.0
libtpu: 0.0.40
codegen_flags: <defaults>
</compile_context>

<pallas_src>
import functools

import jax
import jax.numpy as jnp
from jax.experimental import pallas as pl
from jax.experimental.pallas import tpu as pltpu

# ----------------------------- synthetic small FLAME config -----------------------------
N_BATCH = 2
N_VERTS = 256            # V (real FLAME: 5023)
TOTAL_SHAPES = 32        # real: 300
TOTAL_EXPR = 16          # real: 100
NUM_SHAPES = 24
NUM_EXPR = 12
N_JOINTS = 5
PARENTS = (-1, 0, 1, 1, 1)          # FLAME kintree (head, neck, jaw, l_eye, r_eye)
N_COEFFS = TOTAL_SHAPES + TOTAL_EXPR            # 48
N_POSEFEAT = (N_JOINTS - 1) * 9                 # 36
N_FEAT = N_COEFFS + N_POSEFEAT                  # 84

V3 = N_VERTS * 3                                # 768 (multiple of 128 here)
BLEND_TILE = 384   # lane tile for kernel A; multiple of 128, divides V3.
                   # 2 grid steps keeps both v7x TensorCores fed; at real FLAME
                   # size pad V3 to a multiple of 128 and use 1024-2048 tiles.
LBS_TILE = N_VERTS  # lane tile for LBS; multiple of 128, divides N_VERTS.
# TODO(synk): batch=2 gives sublane-masked stores on the (N, tile) outputs; pad
# the batch to 8 if batch stays tiny in production.


# ----------------------------- Pallas kernels -----------------------------
def _blendshape_kernel(x_ref, dirs_ref, template_ref, posed_ref):
    # posed = template + [coeffs | pose_feat] @ [shapedirs ; posedirs]
    # bases stored bf16 (HBM-bandwidth win); widen to f32 before the dot so the
    # math is f32 on every generation (v5e has no bf16 VPU path).
    d = dirs_ref[...].astype(jnp.float32)
    posed_ref[...] = template_ref[...] + jnp.dot(
        x_ref[...], d, preferred_element_type=jnp.float32)


def _lbs_kernel(tfm_ref, lbsT_ref, posed_ref, out_ref):
    # tfm rows are ordered c*3 + r with value T[b, j, r, c], so
    #   wt[c*3 + r, v] = sum_j T[b, j, r, c] * lbs_w[v, j]
    # and the matmul N-dim is the vertex tile (128-lane dense).
    wt = jnp.dot(tfm_ref[0], lbsT_ref[...], preferred_element_type=jnp.float32)
    p = posed_ref[0]                                   # (3, TILE) coord-major
    out_ref[0] = (wt[0:3] * p[0:1] + wt[3:6] * p[1:2]
                  + wt[6:9] * p[2:3] + wt[9:12])       # (3, TILE)


# ----------------------------- Pallas wrappers -----------------------------
def blendshape_pallas(x, dirs_bf16, template_cm):
    n, f = x.shape
    v3 = dirs_bf16.shape[1]
    grid = (v3 // BLEND_TILE,)
    return pl.pallas_call(
        _blendshape_kernel,
        out_shape=jax.ShapeDtypeStruct((n, v3), jnp.float32),
        grid_spec=pltpu.PrefetchScalarGridSpec(
            num_scalar_prefetch=0,
            grid=grid,
            in_specs=[
                pl.BlockSpec((n, f), lambda j: (0, 0)),
                pl.BlockSpec((f, BLEND_TILE), lambda j: (0, j)),
                pl.BlockSpec((1, BLEND_TILE), lambda j: (0, j)),
            ],
            out_specs=pl.BlockSpec((n, BLEND_TILE), lambda j: (0, j)),
        ),
        compiler_params=pltpu.CompilerParams(dimension_semantics=("parallel",)),
    )(x, dirs_bf16, template_cm)


def lbs_pallas(tfm12, lbsT, posed_cm):
    n, _, v = posed_cm.shape
    j = lbsT.shape[0]
    grid = (n, v // LBS_TILE)
    return pl.pallas_call(
        _lbs_kernel,
        out_shape=jax.ShapeDtypeStruct((n, 3, v), jnp.float32),
        grid_spec=pltpu.PrefetchScalarGridSpec(
            num_scalar_prefetch=0,
            grid=grid,
            in_specs=[
                pl.BlockSpec((1, 12, j), lambda b, t: (b, 0, 0)),
                pl.BlockSpec((j, LBS_TILE), lambda b, t: (0, t)),
                pl.BlockSpec((1, 3, LBS_TILE), lambda b, t: (b, 0, t)),
            ],
            out_specs=pl.BlockSpec((1, 3, LBS_TILE), lambda b, t: (b, 0, t)),
        ),
        compiler_params=pltpu.CompilerParams(
            dimension_semantics=("parallel", "parallel")),
    )(tfm12, lbsT, posed_cm)


# ----------------------------- plain-JAX glue -----------------------------
def rodrigues(rvec, eps=1e-8):
    """(M, 3) axis-angle -> (M, 3, 3) rotation matrices (torch FLAME convention)."""
    angle = jnp.sqrt(jnp.sum((rvec + eps) ** 2, axis=1, keepdims=True))
    axis = rvec / angle
    cos = jnp.cos(angle)[:, :, None]
    sin = jnp.sin(angle)[:, :, None]
    rx, ry, rz = axis[:, 0], axis[:, 1], axis[:, 2]
    zeros = jnp.zeros_like(rx)
    K = jnp.stack([zeros, -rz, ry,
                   rz, zeros, -rx,
                   -ry, rx, zeros], axis=1).reshape(-1, 3, 3)
    eye = jnp.eye(3, dtype=rvec.dtype)[None]
    return eye + sin * K + (1.0 - cos) * jnp.matmul(K, K)


def make_homogeneous(rotations, translations):
    nb, nj = rotations.shape[:2]
    top = jnp.concatenate([rotations, translations[..., None]], axis=-1)
    bottom = jnp.broadcast_to(
        jnp.array([0.0, 0.0, 0.0, 1.0], dtype=rotations.dtype), (nb, nj, 1, 4))
    return jnp.concatenate([top, bottom], axis=-2)


def kinematic_transforms(rotations, joints):
    nb = joints.shape[0]
    homo = make_homogeneous(rotations, joints)
    eye = jnp.broadcast_to(jnp.eye(3, dtype=joints.dtype), (nb, N_JOINTS, 3, 3))
    trans = make_homogeneous(eye, -joints)
    chain = [jnp.matmul(homo[:, 0], trans[:, 0])]
    for i in range(1, N_JOINTS):
        chain.append(jnp.matmul(jnp.matmul(chain[PARENTS[i]], homo[:, i]),
                                trans[:, i]))
    return jnp.stack(chain, axis=1)            # (N, J, 4, 4)


def build_params(template, shapedirs, posedirs, joints_weights, lbs_weights):
    """Precompute fused / lane-friendly parameter layouts (host-side, once)."""
    v = template.shape[0]
    c = shapedirs.shape[-1]
    p = posedirs.shape[-1]
    # coordinate-major flattening: flat index = coord * V + vertex
    shapedirs_cm = shapedirs.transpose(1, 0, 2).reshape(3 * v, c).T       # (C, 3V)
    posedirs_cm = posedirs.transpose(1, 0, 2).reshape(3 * v, p).T         # (36, 3V)
    dirs_cm = jnp.concatenate([shapedirs_cm, posedirs_cm], axis=0)        # (C+36, 3V)
    template_cm = template.T.reshape(1, 3 * v)                            # (1, 3V)
    # reduced joint basis: joints = joints_template + coeffs @ joints_dirs
    joints_template = joints_weights @ template                           # (J, 3)
    joints_dirs = jnp.einsum("jv,vkc->cjk", joints_weights,
                             shapedirs).reshape(c, -1)                    # (C, J*3)
    return {
        "dirs_cm": dirs_cm.astype(jnp.bfloat16),    # bf16 bases: half the HBM read
        "template_cm": template_cm.astype(jnp.float32),
        "joints_template": joints_template.astype(jnp.float32),
        "joints_dirs": joints_dirs.astype(jnp.float32),
        "lbs_weights_T": lbs_weights.T.astype(jnp.float32),               # (J, V)
    }


def flame_forward(params, shape, expression, pose, neck, jaw, left_eye, right_eye):
    dt = jnp.float32
    nb = shape.shape[0]
    shapes_tail = jnp.zeros((nb, TOTAL_SHAPES - NUM_SHAPES), dt)
    expr_tail = jnp.zeros((nb, TOTAL_EXPR - NUM_EXPR), dt)
    coeffs = jnp.concatenate([shape, shapes_tail, expression, expr_tail], axis=1)
    full_pose = jnp.concatenate([pose, neck, jaw, left_eye, right_eye], axis=1)

    rotations = rodrigues(full_pose.reshape(-1, 3)).reshape(nb, N_JOINTS, 3, 3)
    pose_features = (rotations[:, 1:] - jnp.eye(3, dtype=dt)).reshape(nb, -1)

    # kernel A: fused shape/expression + pose-corrective blendshapes -> posed (coord-major)
    x = jnp.concatenate([coeffs, pose_features], axis=1)                  # (N, 84)
    posed_cm = blendshape_pallas(
        x, params["dirs_cm"], params["template_cm"]).reshape(nb, 3, N_VERTS)

    # joint regression via precomputed reduced basis (tiny; plain-JAX glue)
    joints = params["joints_template"][None] + (
        coeffs @ params["joints_dirs"]).reshape(nb, N_JOINTS, 3)
    parents = jnp.array(PARENTS[1:], dtype=jnp.int32)
    relative_joints = joints.at[:, 1:].add(-joints[:, parents])

    # tiny 5-joint kinematic chain stays in plain JAX
    transforms = kinematic_transforms(rotations, joints)                  # (N, J, 4, 4)
    # rows ordered c*3 + r so the LBS kernel uses contiguous sublane slices
    tfm12 = transforms[:, :, :3, :].transpose(0, 3, 2, 1).reshape(nb, 12, N_JOINTS)

    # kernel B: lane-dense linear blend skinning (vertices on the lane axis)
    vertices_cm = lbs_pallas(tfm12, params["lbs_weights_T"], posed_cm)    # (N, 3, V)
    vertices = vertices_cm.transpose(0, 2, 1)                             # (N, V, 3)
    return vertices, relative_joints


def flame_reference(template, shapedirs, posedirs, joints_weights, lbs_weights,
                    shape, expression, pose, neck, jaw, left_eye, right_eye):
    """Pure-JAX f32 mirror of the torch forward, used for verification."""
    dt = jnp.float32
    nb = shape.shape[0]
    shapes_tail = jnp.zeros((nb, TOTAL_SHAPES - NUM_SHAPES), dt)
    expr_tail = jnp.zeros((nb, TOTAL_EXPR - NUM_EXPR), dt)
    coeffs = jnp.concatenate([shape, shapes_tail, expression, expr_tail], axis=1)
    full_pose = jnp.concatenate([pose, neck, jaw, left_eye, right_eye], axis=1)

    shaped = template[None] + jnp.einsum("nc,vkc->nvk", coeffs, shapedirs)
    rotations = rodrigues(full_pose.reshape(-1, 3)).reshape(nb, N_JOINTS, 3, 3)
    pose_features = (rotations[:, 1:] - jnp.eye(3, dtype=dt)).reshape(nb, -1)
    posed = shaped + jnp.einsum("np,vkp->nvk", pose_features, posedirs)

    joints = jnp.einsum("jv,nvk->njk", joints_weights, shaped)
    parents = jnp.array(PARENTS[1:], dtype=jnp.int32)
    relative_joints = joints.at[:, 1:].add(-joints[:, parents])

    transforms = kinematic_transforms(rotations, joints)
    wt = jnp.einsum("vj,njk->nvk", lbs_weights,
                    transforms.reshape(nb, N_JOINTS, 16)).reshape(nb, N_VERTS, 4, 4)
    vertices = (wt[:, :, :3, :3] @ posed[..., None] + wt[:, :, :3, 3:4])[..., 0]
    return vertices, relative_joints


# ----------------------------- main -----------------------------
if __name__ == "__main__":
    # TODO(synk): real FLAME loads pickled blendshape bases / kintree from disk;
    # here they are synthesized deterministically with matching shapes.
    keys = jax.random.split(jax.random.PRNGKey(0), 12)

    template = jax.random.normal(keys[0], (N_VERTS, 3), jnp.float32) * 0.1
    shapedirs = jax.random.normal(keys[1], (N_VERTS, 3, N_COEFFS), jnp.float32) * 0.01
    posedirs = jax.random.normal(keys[2], (N_VERTS, 3, N_POSEFEAT), jnp.float32) * 0.01
    joints_weights = jax.nn.softmax(
        jax.random.normal(keys[3], (N_JOINTS, N_VERTS), jnp.float32), axis=1)
    lbs_weights = jax.nn.softmax(
        jax.random.normal(keys[4], (N_VERTS, N_JOINTS), jnp.float32) * 2.0, axis=1)

    params = build_params(template, shapedirs, posedirs, joints_weights, lbs_weights)

    shape_c = jax.random.normal(keys[5], (N_BATCH, NUM_SHAPES), jnp.float32)
    expr_c = jax.random.normal(keys[6], (N_BATCH, NUM_EXPR), jnp.float32)
    pose = jax.random.normal(keys[7], (N_BATCH, 3), jnp.float32) * 0.2
    neck = jax.random.normal(keys[8], (N_BATCH, 3), jnp.float32) * 0.1
    jaw = jax.random.normal(keys[9], (N_BATCH, 3), jnp.float32) * 0.1
    left_eye = jax.random.normal(keys[10], (N_BATCH, 3), jnp.float32) * 0.05
    right_eye = jax.random.normal(keys[11], (N_BATCH, 3), jnp.float32) * 0.05

    fwd = jax.jit(functools.partial(flame_forward, params))
    vertices, rel_joints = fwd(shape_c, expr_c, pose, neck, jaw, left_eye, right_eye)
    jax.block_until_ready((vertices, rel_joints))

    ref_v, ref_j = flame_reference(template, shapedirs, posedirs, joints_weights,
                                   lbs_weights, shape_c, expr_c, pose, neck, jaw,
                                   left_eye, right_eye)

    assert vertices.shape == (N_BATCH, N_VERTS, 3)
    assert rel_joints.shape == (N_BATCH, N_JOINTS, 3)
    assert jnp.allclose(vertices, ref_v, rtol=2e-2, atol=2e-3)
    assert jnp.allclose(rel_joints, ref_j, rtol=2e-2, atol=2e-3)

    print("KERNEL_OK")
</pallas_src>

<mosaic_0001>
module attributes {stable_mosaic.version = 11 : i64} {
  func.func @_blendshape_kernel(%arg0: i32, %arg1: memref<2x84xf32, #tpu.memory_space<vmem>>, %arg2: memref<84x384xbf16, #tpu.memory_space<vmem>>, %arg3: memref<1x384xf32, #tpu.memory_space<vmem>>, %arg4: memref<2x384xf32, #tpu.memory_space<vmem>>) attributes {dimension_semantics = [#tpu.dimension_semantics<parallel>], iteration_bounds = array<i64: 2>, scalar_prefetch = 0 : i64, scratch_operands = 0 : i64, tpu.core_type = #tpu.core_type<tc>, window_params = [{pipeline_mode = #tpu.pipeline_mode<synchronous>, transform_indices = @transform_0, window_bounds = array<i64: 2, 84>}, {transform_indices = @transform_1, window_bounds = array<i64: 84, 384>}, {transform_indices = @transform_2, window_bounds = array<i64: 1, 384>}, {transform_indices = @transform_3, window_bounds = array<i64: 2, 384>}]} {
    %c0 = arith.constant 0 : index
    %c0_0 = arith.constant 0 : index
    %0 = vector.load %arg2[%c0, %c0_0] : memref<84x384xbf16, #tpu.memory_space<vmem>>, vector<84x384xbf16>
    %1 = arith.extf %0 : vector<84x384xbf16> to vector<84x384xf32>
    %c0_1 = arith.constant 0 : index
    %c0_2 = arith.constant 0 : index
    %2 = vector.load %arg3[%c0_1, %c0_2] : memref<1x384xf32, #tpu.memory_space<vmem>>, vector<1x384xf32>
    %c0_3 = arith.constant 0 : index
    %c0_4 = arith.constant 0 : index
    %3 = vector.load %arg1[%c0_3, %c0_4] : memref<2x84xf32, #tpu.memory_space<vmem>>, vector<2x84xf32>
    %cst = arith.constant dense<0.000000e+00> : vector<2x384xf32>
    %4 = tpu.matmul %3, %1, %cst {dimension_numbers = #tpu.dot_dimension_numbers<[1], [0], [0], [1], [0, 0, 1, 1], [], []>} : vector<2x84xf32>, vector<84x384xf32>, vector<2x384xf32> -> vector<2x384xf32>
    %5 = vector.broadcast %2 : vector<1x384xf32> to vector<2x384xf32>
    %6 = arith.addf %5, %4 : vector<2x384xf32>
    %c0_5 = arith.constant 0 : index
    %c0_6 = arith.constant 0 : index
    %7 = vector.load %arg4[%c0_5, %c0_6] : memref<2x384xf32, #tpu.memory_space<vmem>>, vector<2x384xf32>
    tpu.vector_store %arg4[%c0_5, %c0_6], %6 {strides = array<i32>} : memref<2x384xf32, #tpu.memory_space<vmem>>, vector<2x384xf32>,
    return
  }
  func.func @transform_0(%arg0: i32) -> (i32, i32) {
    %c0_i32 = arith.constant 0 : i32
    %c0_i32_0 = arith.constant 0 : i32
    %c0_i32_1 = arith.constant 0 : i32
    return %c0_i32, %c0_i32_0 : i32, i32
  }
  func.func @transform_1(%arg0: i32) -> (i32, i32) {
    %c0_i32 = arith.constant 0 : i32
    %c0_i32_0 = arith.constant 0 : i32
    return %c0_i32, %arg0 : i32, i32
  }
  func.func @transform_2(%arg0: i32) -> (i32, i32) {
    %c0_i32 = arith.constant 0 : i32
    %c0_i32_0 = arith.constant 0 : i32
    return %c0_i32, %arg0 : i32, i32
  }
  func.func @transform_3(%arg0: i32) -> (i32, i32) {
    %c0_i32 = arith.constant 0 : i32
    %c0_i32_0 = arith.constant 0 : i32
    return %c0_i32, %arg0 : i32, i32
  }
}

module attributes {stable_mosaic.version = 11 : i64} {
  func.func @_lbs_kernel(%arg0: i32, %arg1: i32, %arg2: memref<1x12x5xf32, #tpu.memory_space<vmem>>, %arg3: memref<5x256xf32, #tpu.memory_space<vmem>>, %arg4: memref<1x3x256xf32, #tpu.memory_space<vmem>>, %arg5: memref<1x3x256xf32, #tpu.memory_space<vmem>>) attributes {dimension_semantics = [#tpu.dimension_semantics<parallel>, #tpu.dimension_semantics<parallel>], iteration_bounds = array<i64: 2, 1>, scalar_prefetch = 0 : i64, scratch_operands = 0 : i64, tpu.core_type = #tpu.core_type<tc>, window_params = [{transform_indices = @transform_0, window_bounds = array<i64: 1, 12, 5>}, {transform_indices = @transform_1, window_bounds = array<i64: 5, 256>}, {transform_indices = @transform_2, window_bounds = array<i64: 1, 3, 256>}, {transform_indices = @transform_3, window_bounds = array<i64: 1, 3, 256>}]} {
    %c0 = arith.constant 0 : index
    %c0_0 = arith.constant 0 : index
    %c0_1 = arith.constant 0 : index
    %0 = vector.load %arg2[%c0, %c0_0, %c0_1] : memref<1x12x5xf32, #tpu.memory_space<vmem>>, vector<1x12x5xf32>
    %1 = vector.shape_cast %0 : vector<1x12x5xf32> to vector<12x5xf32>
    %c0_2 = arith.constant 0 : index
    %c0_3 = arith.constant 0 : index
    %2 = vector.load %arg3[%c0_2, %c0_3] : memref<5x256xf32, #tpu.memory_space<vmem>>, vector<5x256xf32>
    %cst = arith.constant dense<0.000000e+00> : vector<12x256xf32>
    %3 = tpu.matmul %1, %2, %cst {dimension_numbers = #tpu.dot_dimension_numbers<[1], [0], [0], [1], [0, 0, 1, 1], [], []>} : vector<12x5xf32>, vector<5x256xf32>, vector<12x256xf32> -> vector<12x256xf32>
    %c0_4 = arith.constant 0 : index
    %c0_5 = arith.constant 0 : index
    %c0_6 = arith.constant 0 : index
    %4 = vector.load %arg4[%c0_4, %c0_5, %c0_6] : memref<1x3x256xf32, #tpu.memory_space<vmem>>, vector<1x3x256xf32>
    %5 = vector.shape_cast %4 : vector<1x3x256xf32> to vector<3x256xf32>
    %6 = vector.extract_strided_slice %3 {offsets = [0, 0], sizes = [3, 256], strides = [1, 1]} : vector<12x256xf32> to vector<3x256xf32>
    %7 = vector.extract_strided_slice %5 {offsets = [0, 0], sizes = [1, 256], strides = [1, 1]} : vector<3x256xf32> to vector<1x256xf32>
    %8 = vector.broadcast %7 : vector<1x256xf32> to vector<3x256xf32>
    %9 = arith.mulf %6, %8 : vector<3x256xf32>
    %10 = vector.extract_strided_slice %3 {offsets = [3, 0], sizes = [3, 256], strides = [1, 1]} : vector<12x256xf32> to vector<3x256xf32>
    %11 = vector.extract_strided_slice %5 {offsets = [1, 0], sizes = [1, 256], strides = [1, 1]} : vector<3x256xf32> to vector<1x256xf32>
    %12 = vector.broadcast %11 : vector<1x256xf32> to vector<3x256xf32>
    %13 = arith.mulf %10, %12 : vector<3x256xf32>
    %14 = arith.addf %9, %13 : vector<3x256xf32>
    %15 = vector.extract_strided_slice %3 {offsets = [6, 0], sizes = [3, 256], strides = [1, 1]} : vector<12x256xf32> to vector<3x256xf32>
    %16 = vector.extract_strided_slice %5 {offsets = [2, 0], sizes = [1, 256], strides = [1, 1]} : vector<3x256xf32> to vector<1x256xf32>
    %17 = vector.broadcast %16 : vector<1x256xf32> to vector<3x256xf32>
    %18 = arith.mulf %15, %17 : vector<3x256xf32>
    %19 = arith.addf %14, %18 : vector<3x256xf32>
    %20 = vector.extract_strided_slice %3 {offsets = [9, 0], sizes = [3, 256], strides = [1, 1]} : vector<12x256xf32> to vector<3x256xf32>
    %21 = arith.addf %19, %20 : vector<3x256xf32>
    %c0_7 = arith.constant 0 : index
    %c0_8 = arith.constant 0 : index
    %c0_9 = arith.constant 0 : index
    %22 = vector.load %arg5[%c0_7, %c0_8, %c0_9] : memref<1x3x256xf32, #tpu.memory_space<vmem>>, vector<1x3x256xf32>
    %23 = vector.shape_cast %22 : vector<1x3x256xf32> to vector<3x256xf32>
    %24 = vector.shape_cast %21 : vector<3x256xf32> to vector<1x3x256xf32>
    tpu.vector_store %arg5[%c0_7, %c0_8, %c0_9], %24 {strides = array<i32>} : memref<1x3x256xf32, #tpu.memory_space<vmem>>, vector<1x3x256xf32>,
    return
  }
  func.func @transform_0(%arg0: i32, %arg1: i32) -> (i32, i32, i32) {
    %c0_i32 = arith.constant 0 : i32
    %c0_i32_0 = arith.constant 0 : i32
    %c0_i32_1 = arith.constant 0 : i32
    return %arg0, %c0_i32, %c0_i32_0 : i32, i32, i32
  }
  func.func @transform_1(%arg0: i32, %arg1: i32) -> (i32, i32) {
    %c0_i32 = arith.constant 0 : i32
    %c0_i32_0 = arith.constant 0 : i32
    return %c0_i32, %arg1 : i32, i32
  }
  func.func @transform_2(%arg0: i32, %arg1: i32) -> (i32, i32, i32) {
    %c0_i32 = arith.constant 0 : i32
    %c0_i32_0 = arith.constant 0 : i32
    return %arg0, %c0_i32, %arg1 : i32, i32, i32
  }
  func.func @transform_3(%arg0: i32, %arg1: i32) -> (i32, i32, i32) {
    %c0_i32 = arith.constant 0 : i32
    %c0_i32_0 = arith.constant 0 : i32
    return %arg0, %c0_i32, %arg1 : i32, i32, i32
  }
}

</mosaic_0001>

<llo_original>
// kernel: flame_forward.2
$region0: #{flame_forward.2}
  #allocation0 [shape = 'u32[]', space=smem, size = 0x4, offset = 0x4, fixed_abs, tag = 'smem constant byte address 0x4 - core index']
  #allocation1 [shape = 'u32[72,128]{1,0:T(1,128)}', space=vmem, size = 0x9000, scoped, tag = 'internal scratch']
  %s0 = inlined_call_operand.vmem [shape: f32[2,84], index: 0, kind: input, shape index: {}]
  %s1 = inlined_call_operand.vmem [shape: bf16[84,768], index: 1, kind: input, shape index: {}]
  %s2 = inlined_call_operand.vmem [shape: f32[1,768], index: 2, kind: input, shape index: {}]
  %s3 = inlined_call_operand.vmem [shape: f32[2,768], index: 3, kind: output, shape index: {}]
  %s4 = sld [smem:[#allocation0]]
  $region71: #{flame_forward.2} parent=0
    _
  %s6 = ssub.s32 1, %s4
  %s7 = scalar_select 0, %s6, %s4
  $region1: #{flame_forward.2} parent=0
    #allocation2 [shape = 'u8[135168]{0}', space=vmem, size = 0x21000, scoped, tag = 'input window, operand 1']
    loop: start=0, step=1, limit=4
    $region2: #{flame_forward.2} parent=1 // loop_pre_header
      _
    $region3: #{flame_forward.2} parent=1 // loop_header
      %s9 = sphi 0, %s13
      %p10 = scmp.ge.s32.totalorder %s9, 4
      %s17 = sphi 0, %s17
      %s19 = sphi 0, %s17
      %s20 = sphi 0, %s19
      %s34 = sphi 0, %s20
      %s40 = sphi 0, %s42
      %s43 = sphi 0, %s40
      %s44 = sphi 0, %s43
      %s60 = sphi 0, %s44
      %s66 = sphi 0, %s68
      %s69 = sphi 0, %s66
      %s70 = sphi 0, %s69
      %s86 = sphi 0, %s70
      %s92 = sphi 0, %s94
      %s95 = sphi 0, %s92
      %s96 = sphi 0, %s95
      %s112 = sphi 0, %s96
    $region4: #{flame_forward.2} parent=1 // loop_header_branch
      %12 = sbr.rel (%p10) target = $region8
    $region5: #{flame_forward.2} parent=1 // loop_body
      %s14 = ssub.s32 %s9, 1
      %s15 = ssub.s32 %s9, 2
      %s16 = sadd.s32 %s9, 1
      %s18 = sadd.s32 %s17, 1
      %p21 = scmp.eq.s32.totalorder %s9, 1
      %p22 = scmp.ne.s32.totalorder %s17, %s19
      %p23 = scmp.eq.s32.totalorder %s9, 0
      %p24 = por %p22, %p23
      %p25 = scmp.ne.s32.totalorder %s17, %s19
      %p26 = scmp.eq.s32.totalorder %s14, 1
      %p27 = por %p25, %p26
      %p28 = scmp.ne.s32.totalorder %s19, %s20
      %p29 = scmp.eq.s32.totalorder %s14, 0
      %p30 = por %p28, %p29
      %p31 = scmp.ne.s32.totalorder %s19, %s20
      %p32 = scmp.eq.s32.totalorder %s15, 1
      %p33 = por %p31, %p32
      %p35 = scmp.ne.s32.totalorder %s20, %s34
      %p36 = scmp.eq.s32.totalorder %s15, 0
      %p37 = por %p35, %p36
      %s38 = ssub.s32 %s9, %s16
      %p39 = scmp.eq.s32.totalorder %s38, 0
      %s41 = sadd.s32 %s40, 1
      %s42 = scalar_select %p39, %s40, %s41
      %p45 = pneg %p39
      %p46 = scmp.eq.s32.totalorder %s9, 1
      %p47 = por %p45, %p46
      %p48 = scmp.ne.s32.totalorder %s40, %s43
      %p49 = scmp.eq.s32.totalorder %s9, 0
      %p50 = por %p48, %p49
      %p51 = scmp.ne.s32.totalorder %s40, %s43
      %p52 = scmp.eq.s32.totalorder %s14, 1
      %p53 = por %p51, %p52
      %p54 = scmp.ne.s32.totalorder %s43, %s44
      %p55 = scmp.eq.s32.totalorder %s14, 0
      %p56 = por %p54, %p55
      %p57 = scmp.ne.s32.totalorder %s43, %s44
      %p58 = scmp.eq.s32.totalorder %s15, 1
      %p59 = por %p57, %p58
      %p61 = scmp.ne.s32.totalorder %s44, %s60
      %p62 = scmp.eq.s32.totalorder %s15, 0
      %p63 = por %p61, %p62
      %s64 = ssub.s32 %s9, %s16
      %p65 = scmp.eq.s32.totalorder %s64, 0
      %s67 = sadd.s32 %s66, 1
      %s68 = scalar_select %p65, %s66, %s67
      %p71 = pneg %p65
      %p72 = scmp.eq.s32.totalorder %s9, 1
      %p73 = por %p71, %p72
      %p74 = scmp.ne.s32.totalorder %s66, %s69
      %p75 = scmp.eq.s32.totalorder %s9, 0
      %p76 = por %p74, %p75
      %p77 = scmp.ne.s32.totalorder %s66, %s69
      %p78 = scmp.eq.s32.totalorder %s14, 1
      %p79 = por %p77, %p78
      %p80 = scmp.ne.s32.totalorder %s69, %s70
      %p81 = scmp.eq.s32.totalorder %s14, 0
      %p82 = por %p80, %p81
      %p83 = scmp.ne.s32.totalorder %s69, %s70
      %p84 = scmp.eq.s32.totalorder %s15, 1
      %p85 = por %p83, %p84
      %p87 = scmp.ne.s32.totalorder %s70, %s86
      %p88 = scmp.eq.s32.totalorder %s15, 0
      %p89 = por %p87, %p88
      %s90 = ssub.s32 %s9, %s16
      %p91 = scmp.eq.s32.totalorder %s90, 0
      %s93 = sadd.s32 %s92, 1
      %s94 = scalar_select %p91, %s92, %s93
      %p97 = pneg %p91
      %p98 = scmp.eq.s32.totalorder %s9, 1
      %p99 = por %p97, %p98
      %p100 = scmp.ne.s32.totalorder %s92, %s95
      %p101 = scmp.eq.s32.totalorder %s9, 0
      %p102 = por %p100, %p101
      %p103 = scmp.ne.s32.totalorder %s92, %s95
      %p104 = scmp.eq.s32.totalorder %s14, 1
      %p105 = por %p103, %p104
      %p106 = scmp.ne.s32.totalorder %s95, %s96
      %p107 = scmp.eq.s32.totalorder %s14, 0
      %p108 = por %p106, %p107
      %p109 = scmp.ne.s32.totalorder %s95, %s96
      %p110 = scmp.eq.s32.totalorder %s15, 1
      %p111 = por %p109, %p110
      %p113 = scmp.ne.s32.totalorder %s96, %s112
      %p114 = scmp.eq.s32.totalorder %s15, 0
      %p115 = por %p113, %p114
      %p116 = scmp.le.s32.totalorder 1, %s9
      %p117 = scmp.lt.s32.totalorder %s9, 3
      %p118 = pnand %p116, %p117
      %p119 = pneg %p118
      // Predicated region
      $region9: #{flame_forward.2} parent=5 // pred_check
        _
      $region10: #{flame_forward.2} parent=5 // pred_check_branch
        %121 = sbr.rel (%p118) target = $region12
      $region11: #{flame_forward.2} parent=5 // pred_region
        %s122 = ssub.s32 %s9, 1
        // Predicated region
        $region13: #{flame_forward.2} parent=11 // pred_check
          %p123 = pneg %p30
        $region14: #{flame_forward.2} parent=11 // pred_check_branch
          %125 = sbr.rel (%p123) target = $region16
        $region15: #{flame_forward.2} parent=11 // pred_region
          _
        $region16: #{flame_forward.2} parent=11 // pred_fallthru
          _
      $region12: #{flame_forward.2} parent=5 // pred_fallthru
        _
      %p126 = scmp.lt.s32.totalorder %s9, 2
      // Predicated region
      $region17: #{flame_forward.2} parent=5 // pred_check
        %p127 = pneg %p126
      $region18: #{flame_forward.2} parent=5 // pred_check_branch
        %129 = sbr.rel (%p127) target = $region20
      $region19: #{flame_forward.2} parent=5 // pred_region
        // Predicated region
        $region21: #{flame_forward.2} parent=19 // pred_check
          %p130 = pneg %p50
        $region22: #{flame_forward.2} parent=19 // pred_check_branch
          %132 = sbr.rel (%p130) target = $region24
        $region23: #{flame_forward.2} parent=19 // pred_region
          %s133 = sand.u32 %s40, 1
          %s134 = sand.u32 %s40, 1
          %s135 = smul.addr %s134, 132
          %s136 = scalar_lea.vmem [#allocation2], %s135
          %s137 = smul.u32 3, %s9
          %s138 = smul.addr %s137, 4
          %s139 = scalar_lea.vmem %s1, %s138
          // Predicated region
          $region25: #{flame_forward.2} parent=23 // pred_check
            _
          $region26: #{flame_forward.2} parent=23 // pred_check_branch
            %141 = sbr.rel (0) target = $region28
          $region27: #{flame_forward.2} parent=23 // pred_region
            // Predicated region
            $region29: #{flame_forward.2} parent=27 // pred_check
              _
            $region30: #{flame_forward.2} parent=27 // pred_check_branch
              %143 = sbr.rel (0) target = $region32
            $region31: #{flame_forward.2} parent=27 // pred_region
              %s144 = scalar_lea.vmem %s139, 8
              %s145 = scalar_lea.vmem %s136, 8 [#allocation2]
              loop: start=0, step=1, limit=1
              $region33: #{flame_forward.2} parent=31 // loop_pre_header
                _
              $region34: #{flame_forward.2} parent=31 // loop_header
                %s147 = sphi 0, %s151
                %p148 = scmp.ge.s32.totalorder %s147, 1
                %s152 = sphi %s139, %s139
                %s153 = sphi %s136, %s136
              $region35: #{flame_forward.2} parent=31 // loop_header_branch
                %150 = sbr.rel (%p148) target = $region39
              $region36: #{flame_forward.2} parent=31 // loop_body
                %v154 = vld [vmem:[%s152] sm:$0xff]
                %155 = vst [vmem:[%s153] sm:$0xff] %v154
                %v156 = vld [vmem:[%s152 + $0x18] sm:$0xff]
                %157 = vst [vmem:[%s153 + $0xc] sm:$0xff] %v156
                %v158 = vld [vmem:[%s152 + $0x30] sm:$0xff]
                %159 = vst [vmem:[%s153 + $0x18] sm:$0xff] %v158
                %v160 = vld [vmem:[%s152 + $0x48] sm:$0xff]
                %161 = vst [vmem:[%s153 + $0x24] sm:$0xff] %v160
                %v162 = vld [vmem:[%s152 + $0x60] sm:$0xff]
                %163 = vst [vmem:[%s153 + $0x30] sm:$0xff] %v162
                %v164 = vld [vmem:[%s152 + $0x78] sm:$0xff]
                %165 = vst [vmem:[%s153 + $0x3c] sm:$0xff] %v164
                %v166 = vld [vmem:[%s152 + $0x90] sm:$0xff]
                %167 = vst [vmem:[%s153 + $0x48] sm:$0xff] %v166
                %v168 = vld [vmem:[%s152 + $0xa8] sm:$0xff]
                %169 = vst [vmem:[%s153 + $0x54] sm:$0xff] %v168
                %v170 = vld [vmem:[%s152 + $0xc0] sm:$0xff]
                %171 = vst [vmem:[%s153 + $0x60] sm:$0xff] %v170
                %v172 = vld [vmem:[%s152 + $0xd8] sm:$0xff]
                %173 = vst [vmem:[%s153 + $0x6c] sm:$0xff] %v172
                %v174 = vld [vmem:[%s152 + $0xf0] sm:$0xff]
                %175 = vst [vmem:[%s153 + $0x78] sm:$0xff] %v174
              $region37: #{flame_forward.2} parent=31 // loop_footer
                %s151 = sadd.s32 1, %s147
              $region38: #{flame_forward.2} parent=31 // loop_footer_branch
                %146 = sbr.rel target = $region34
              $region39: #{flame_forward.2} parent=31 // loop_exit
                _
              %s177 = ssub.s32 16, 1
              loop: start=0, step=1, limit=1
              $region40: #{flame_forward.2} parent=31 // loop_pre_header
                _
              $region41: #{flame_forward.2} parent=31 // loop_header
                %s179 = sphi 0, %s183
                %p180 = scmp.ge.s32.totalorder %s179, 1
                %s184 = sphi %s144, %s144
                %s185 = sphi %s145, %s145
              $region42: #{flame_forward.2} parent=31 // loop_header_branch
                %182 = sbr.rel (%p180) target = $region46
              $region43: #{flame_forward.2} parent=31 // loop_body
                %v186 = vld [vmem:[%s184] sm:%s177]
                %187 = vst [vmem:[%s185] sm:%s177] %v186
                %v188 = vld [vmem:[%s184 + $0x18] sm:%s177]
                %189 = vst [vmem:[%s185 + $0xc] sm:%s177] %v188
                %v190 = vld [vmem:[%s184 + $0x30] sm:%s177]
                %191 = vst [vmem:[%s185 + $0x18] sm:%s177] %v190
                %v192 = vld [vmem:[%s184 + $0x48] sm:%s177]
                %193 = vst [vmem:[%s185 + $0x24] sm:%s177] %v192
                %v194 = vld [vmem:[%s184 + $0x60] sm:%s177]
                %195 = vst [vmem:[%s185 + $0x30] sm:%s177] %v194
                %v196 = vld [vmem:[%s184 + $0x78] sm:%s177]
                %197 = vst [vmem:[%s185 + $0x3c] sm:%s177] %v196
                %v198 = vld [vmem:[%s184 + $0x90] sm:%s177]
                %199 = vst [vmem:[%s185 + $0x48] sm:%s177] %v198
                %v200 = vld [vmem:[%s184 + $0xa8] sm:%s177]
                %201 = vst [vmem:[%s185 + $0x54] sm:%s177] %v200
                %v202 = vld [vmem:[%s184 + $0xc0] sm:%s177]
                %203 = vst [vmem:[%s185 + $0x60] sm:%s177] %v202
                %v204 = vld [vmem:[%s184 + $0xd8] sm:%s177]
                %205 = vst [vmem:[%s185 + $0x6c] sm:%s177] %v204
                %v206 = vld [vmem:[%s184 + $0xf0] sm:%s177]
                %207 = vst [vmem:[%s185 + $0x78] sm:%s177] %v206
              $region44: #{flame_forward.2} parent=31 // loop_footer
                %s183 = sadd.s32 1, %s179
              $region45: #{flame_forward.2} parent=31 // loop_footer_branch
                %178 = sbr.rel target = $region41
              $region46: #{flame_forward.2} parent=31 // loop_exit
                _
            $region32: #{flame_forward.2} parent=27 // pred_fallthru
              _
          $region28: #{flame_forward.2} parent=23 // pred_fallthru
            _
          %208 = vnop
        $region24: #{flame_forward.2} parent=19 // pred_fallthru
          _
        // Predicated region
        $region47: #{flame_forward.2} parent=19 // pred_check
          %p209 = pneg %p76
        $region48: #{flame_forward.2} parent=19 // pred_check_branch
          %211 = sbr.rel (%p209) target = $region50
        $region49: #{flame_forward.2} parent=19 // pred_region
          %s212 = smul.u32 3, %s9
          %p213 = scmp.lt.s32.totalorder %s212, 5
          %s214 = scalar_select %p213, %s212, 5
          %s215 = scalar_lea.vmem %s2, %s214
          %s216 = smul.u32 3, %s9
        $region50: #{flame_forward.2} parent=19 // pred_fallthru
          _
      $region20: #{flame_forward.2} parent=5 // pred_fallthru
        _
      %p217 = scmp.le.s32.totalorder 1, %s9
      %p218 = scmp.lt.s32.totalorder %s9, 3
      %p219 = pnand %p217, %p218
      %p220 = pneg %p219
      // Predicated region
      $region51: #{flame_forward.2} parent=5 // pred_check
        _
      $region52: #{flame_forward.2} parent=5 // pred_check_branch
        %222 = sbr.rel (%p219) target = $region54
      $region53: #{flame_forward.2} parent=5 // pred_region
        %s223 = ssub.s32 %s9, 1
        %s224 = sand.u32 %s43, 1
        %s225 = sand.u32 %s43, 1
        %s226 = smul.addr %s225, 132
        %s227 = scalar_lea.vmem [#allocation2], %s226
        // Predicated region
        $region55: #{flame_forward.2} parent=53 // pred_check
          %p228 = pneg %p56
        $region56: #{flame_forward.2} parent=53 // pred_check_branch
          %230 = sbr.rel (%p228) target = $region58
        $region57: #{flame_forward.2} parent=53 // pred_region
          _
        $region58: #{flame_forward.2} parent=53 // pred_fallthru
          _
        %p231 = pneg %p30
        %p232 = pneg %p27
        %s233 = sand.u32 %s43, 1
        %s234 = sand.u32 %s43, 1
        %s235 = smul.addr %s234, 132
        %s236 = scalar_lea.vmem [#allocation2], %s235
        %p237 = pneg %p56
        %p238 = pneg %p53
        %s239 = smul.u32 3, %s14
        %p240 = scmp.lt.s32.totalorder %s239, 5
        %s241 = scalar_select %p240, %s239, 5
        %s242 = scalar_lea.vmem %s2, %s241
        %p243 = pneg %p82
        %p244 = pneg %p79
        %p245 = pneg %p108
        %p246 = pneg %p105
        %s247 = smul.u32 3, %s14
        %p248 = scmp.lt.s32.totalorder %s247, 5
        %s249 = scalar_select %p248, %s247, 5
        %s250 = smul.addr %s249, 2
        %s251 = scalar_lea.vmem %s3, %s250
        %s252 = smul.u32 3, %s14
        %s253 = smul.u32 3, %s14
        %p254 = scmp.lt.s32.totalorder %s253, 5
        %s255 = scalar_select %p254, %s253, 5
        %s256 = scalar_lea.vmem %s2, %s255
        %s257 = smul.u32 3, %s14
        %s258 = smul.u32 3, %s14
        %p259 = scmp.lt.s32.totalorder %s258, 5
        %s260 = scalar_select %p259, %s258, 5
        %s261 = smul.addr %s260, 2
        %s262 = scalar_lea.vmem %s3, %s261
        %s263 = smul.u32 3, %s14
        %v264 = vld [vmem:[%s227] sm:$0xff]
        %v265 = vld [vmem:[%s227 + $0x8] sm:$0xf]
        %v266 = vld [vmem:[%s227 + $0xc] sm:$0xff]
        %v267 = vld [vmem:[%s227 + $0x14] sm:$0xf]
        %v268 = vld [vmem:[%s227 + $0x18] sm:$0xff]
        %v269 = vld [vmem:[%s227 + $0x20] sm:$0xf]
        %v270 = vld [vmem:[%s227 + $0x24] sm:$0xff]
        %v271 = vld [vmem:[%s227 + $0x2c] sm:$0xf]
        %v272 = vld [vmem:[%s227 + $0x30] sm:$0xff]
        %v273 = vld [vmem:[%s227 + $0x38] sm:$0xf]
        %v274 = vld [vmem:[%s227 + $0x3c] sm:$0xff]
        %v275 = vld [vmem:[%s227 + $0x44] sm:$0xf]
        %v276 = vld [vmem:[%s227 + $0x48] sm:$0xff]
        %v277 = vld [vmem:[%s227 + $0x50] sm:$0xf]
        %v278 = vld [vmem:[%s227 + $0x54] sm:$0xff]
        %v279 = vld [vmem:[%s227 + $0x5c] sm:$0xf]
        %v280 = vld [vmem:[%s227 + $0x60] sm:$0xff]
        %v281 = vld [vmem:[%s227 + $0x68] sm:$0xf]
        %v282 = vld [vmem:[%s227 + $0x6c] sm:$0xff]
        %v283 = vld [vmem:[%s227 + $0x74] sm:$0xf]
        %v284 = vld [vmem:[%s227 + $0x78] sm:$0x33]
        %v285 = vld [vmem:[%s227 + $0x80] sm:$0x3]
        %v286 = vunpack.c.l.bf16 %v264
        %v287 = vunpack.c.h.bf16 %v264
        %v288 = vunpack.c.l.bf16 %v265
        %v289 = vunpack.c.l.bf16 %v266
        %v290 = vunpack.c.h.bf16 %v266
        %v291 = vunpack.c.l.bf16 %v267
        %v292 = vunpack.c.l.bf16 %v268
        %v293 = vunpack.c.h.bf16 %v268
        %v294 = vunpack.c.l.bf16 %v269
        %v295 = vunpack.c.l.bf16 %v270
        %v296 = vunpack.c.h.bf16 %v270
        %v297 = vunpack.c.l.bf16 %v271
        %v298 = vunpack.c.l.bf16 %v272
        %v299 = vunpack.c.h.bf16 %v272
        %v300 = vunpack.c.l.bf16 %v273
        %v301 = vunpack.c.l.bf16 %v274
        %v302 = vunpack.c.h.bf16 %v274
        %v303 = vunpack.c.l.bf16 %v275
        %v304 = vunpack.c.l.bf16 %v276
        %v305 = vunpack.c.h.bf16 %v276
        %v306 = vunpack.c.l.bf16 %v277
        %v307 = vunpack.c.l.bf16 %v278
        %v308 = vunpack.c.h.bf16 %v278
        %v309 = vunpack.c.l.bf16 %v279
        %v310 = vunpack.c.l.bf16 %v280
        %v311 = vunpack.c.h.bf16 %v280
        %v312 = vunpack.c.l.bf16 %v281
        %v313 = vunpack.c.l.bf16 %v282
        %v314 = vunpack.c.h.bf16 %v282
        %v315 = vunpack.c.l.bf16 %v283
        %v316 = vunpack.c.l.bf16 %v284
        %v317 = vunpack.c.h.bf16 %v284
        %v318 = vunpack.c.l.bf16 %v285
        %v319 = vld [vmem:[%s256] sm:$0x7]
        %v320 = vld [vmem:[%s0] sm:$0x3]
        %vm321 = vcmask 687104
        %v323 = vsel %vm321, %v320, 0
        %vm325 = vcmask 1043456
        %v327 = vsel %vm325, %v316, 0
        %v330 = vsel %vm325, %v317, 0
        %v333 = vsel %vm325, %v318, 0
        %335 = vmatpush.msra.mxu0 0.0
        %336 = vmatpush.msra.mxu0 0.0
        %337 = vmatpush.msra.mxu0 0.0
        %338 = vmatpush.msra.mxu0 0.0
        %339 = vmatpush.msra.mxu0 0.0
        %340 = vmatpush.msra.mxu0 %v327
        %341 = vmatpush.msra.mxu0 %v313
        %342 = vmatpush.msra.mxu0 %v310
        %343 = vmatpush.msra.mxu0 %v307
        %344 = vmatpush.msra.mxu0 %v304
        %345 = vmatpush.msra.mxu0 %v301
        %346 = vmatpush.msra.mxu0 %v298
        %347 = vmatpush.msra.mxu0 %v295
        %348 = vmatpush.msra.mxu0 %v292
        %349 = vmatpush.msra.mxu0 %v289
        %350 = vmatpush.msra.mxu0 %v286
        %351 = vmatmul.f32.gmra.mxu0 %v323
        %v352 = vpop.f32.mrf.mxu0
        %v353 = vadd.f32 0.0, %v352
        %354 = vdwg.mxu0
        %355 = vmatpush.msra.mxu0 0.0
        %356 = vmatpush.msra.mxu0 0.0
        %357 = vmatpush.msra.mxu0 0.0
        %358 = vmatpush.msra.mxu0 0.0
        %359 = vmatpush.msra.mxu0 0.0
        %360 = vmatpush.msra.mxu0 %v330
        %361 = vmatpush.msra.mxu0 %v314
        %362 = vmatpush.msra.mxu0 %v311
        %363 = vmatpush.msra.mxu0 %v308
        %364 = vmatpush.msra.mxu0 %v305
        %365 = vmatpush.msra.mxu0 %v302
        %366 = vmatpush.msra.mxu0 %v299
        %367 = vmatpush.msra.mxu0 %v296
        %368 = vmatpush.msra.mxu0 %v293
        %369 = vmatpush.msra.mxu0 %v290
        %370 = vmatpush.msra.mxu0 %v287
        %371 = vmatmul.f32.gmra.mxu0 %v323
        %v372 = vpop.f32.mrf.mxu0
        %v373 = vadd.f32 0.0, %v372
        %374 = vdwg.mxu0
        %375 = vmatpush.msra.mxu0 0.0
        %376 = vmatpush.msra.mxu0 0.0
        %377 = vmatpush.msra.mxu0 0.0
        %378 = vmatpush.msra.mxu0 0.0
        %379 = vmatpush.msra.mxu0 0.0
        %380 = vmatpush.msra.mxu0 %v333
        %381 = vmatpush.msra.mxu0 %v315
        %382 = vmatpush.msra.mxu0 %v312
        %383 = vmatpush.msra.mxu0 %v309
        %384 = vmatpush.msra.mxu0 %v306
        %385 = vmatpush.msra.mxu0 %v303
        %386 = vmatpush.msra.mxu0 %v300
        %387 = vmatpush.msra.mxu0 %v297
        %388 = vmatpush.msra.mxu0 %v294
        %389 = vmatpush.msra.mxu0 %v291
        %390 = vmatpush.msra.mxu0 %v288
        %391 = vmatmul.f32.gmra.mxu0 %v323
        %v392 = vpop.f32.mrf.mxu0
        %v393 = vadd.f32 0.0, %v392
        %394 = vdwg.mxu0
        %v396 = vperm.slane %v319, 0
        %v397 = vperm.slane %v319, 1
        %v398 = vperm.slane %v319, 2
        %v402 = vadd.f32 %v396, %v353
        %v403 = vadd.f32 %v397, %v373
        %v404 = vadd.f32 %v398, %v393
        %v408 = vrot.slane %v403, 6
        %v409 = vrot.slane %v404, 4
        %vm410 = vcmask 1041408
        %v411 = vsel %vm410, %v402, %v408
        %v412 = vsel %vm325, %v411, %v409
        %414 = vst [vmem:[%s262] sm:$0x3f] %v412
        %s415 = smul.u32 3, %s14
        %p416 = scmp.lt.s32.totalorder %s415, 5
        %s417 = scalar_select %p416, %s415, 5
        %s418 = smul.addr %s417, 2
        %s419 = scalar_lea.vmem %s3, %s418
        // Predicated region
        $region59: #{flame_forward.2} parent=53 // pred_check
          %p420 = pneg %p105
        $region60: #{flame_forward.2} parent=53 // pred_check_branch
          %422 = sbr.rel (%p420) target = $region62
        $region61: #{flame_forward.2} parent=53 // pred_region
          %s423 = smul.u32 3, %s14
        $region62: #{flame_forward.2} parent=53 // pred_fallthru
          _
      $region54: #{flame_forward.2} parent=5 // pred_fallthru
        _
      %p424 = scmp.le.s32.totalorder 2, %s9
      // Predicated region
      $region63: #{flame_forward.2} parent=5 // pred_check
        %p425 = pneg %p424
      $region64: #{flame_forward.2} parent=5 // pred_check_branch
        %427 = sbr.rel (%p425) target = $region66
      $region65: #{flame_forward.2} parent=5 // pred_region
        %s428 = ssub.s32 %s9, 2
        // Predicated region
        $region67: #{flame_forward.2} parent=65 // pred_check
          %p429 = pneg %p111
        $region68: #{flame_forward.2} parent=65 // pred_check_branch
          %431 = sbr.rel (%p429) target = $region70
        $region69: #{flame_forward.2} parent=65 // pred_region
          %s432 = smul.u32 3, %s15
          %p433 = scmp.lt.s32.totalorder %s432, 5
          %s434 = scalar_select %p433, %s432, 5
          %s435 = smul.addr %s434, 2
          %s436 = scalar_lea.vmem %s3, %s435
        $region70: #{flame_forward.2} parent=65 // pred_fallthru
          _
      $region66: #{flame_forward.2} parent=5 // pred_fallthru
        _
    $region6: #{flame_forward.2} parent=1 // loop_footer
      %s13 = sadd.s32 1, %s9
    $region7: #{flame_forward.2} parent=1 // loop_footer_branch
      %8 = sbr.rel target = $region3
    $region8: #{flame_forward.2} parent=1 // loop_exit
      _

// kernel: flame_forward.3
$region0: #{flame_forward.3}
  #allocation0 [shape = 'u32[]', space=smem, size = 0x4, offset = 0x4, fixed_abs, tag = 'smem constant byte address 0x4 - core index']
  #allocation1 [shape = 'u32[72,128]{1,0:T(1,128)}', space=vmem, size = 0x9000, scoped, tag = 'internal scratch']
  %s0 = inlined_call_operand.vmem [shape: f32[2,12,5], index: 0, kind: input, shape index: {}]
  %s1 = inlined_call_operand.vmem [shape: f32[5,256], index: 1, kind: input, shape index: {}]
  %s2 = inlined_call_operand.vmem [shape: f32[2,3,256], index: 2, kind: input, shape index: {}]
  %s3 = inlined_call_operand.vmem [shape: f32[2,3,256], index: 3, kind: output, shape index: {}]
  %s4 = sld [smem:[#allocation0]]
  $region45: #{flame_forward.3} parent=0
    _
  %s6 = ssub.s32 1, %s4
  %s7 = scalar_select 0, %s6, %s4
  loop: start=0, step=1, limit=4
  $region2: #{flame_forward.3} parent=0 // loop_pre_header
    _
  $region3: #{flame_forward.3} parent=0 // loop_header
    %s9 = sphi 0, %s13
    %p10 = scmp.ge.s32.totalorder %s9, 4
    %s16 = sphi 0, %s28
    %s17 = sphi 0, %s24
    %s18 = sphi 0, %s16
    %s19 = sphi 0, %s17
    %s20 = sphi 0, %s18
    %s21 = sphi 0, %s19
    %s31 = sphi 0, %s33
    %s34 = sphi 0, %s31
    %s35 = sphi 0, %s34
    %s51 = sphi 0, %s35
    %s57 = sphi 0, %s59
    %s60 = sphi 0, %s57
    %s61 = sphi 0, %s60
    %s77 = sphi 0, %s61
    %s85 = sphi 0, %s87
    %s88 = sphi 0, %s85
    %s89 = sphi 0, %s88
    %s105 = sphi 0, %s89
    %s113 = sphi 0, %s115
    %s116 = sphi 0, %s113
    %s117 = sphi 0, %s116
    %s133 = sphi 0, %s117
  $region4: #{flame_forward.3} parent=0 // loop_header_branch
    %12 = sbr.rel (%p10) target = $region8
  $region5: #{flame_forward.3} parent=0 // loop_body
    %s14 = ssub.s32 %s9, 1
    %s15 = ssub.s32 %s9, 2
    %s22 = sadd.s32 1, %s17
    %p23 = scmp.ge.s32.totalorder %s22, 1
    %s24 = scalar_select %p23, 0, %s22
    %s25 = sadd.s32 1, %s16
    %s26 = scalar_select %p23, %s25, %s16
    %p27 = scmp.ge.s32.totalorder %s26, 2
    %s28 = scalar_select %p27, 0, %s26
    %s29 = ssub.s32 %s16, %s28
    %p30 = scmp.eq.s32.totalorder %s29, 0
    %s32 = sadd.s32 %s31, 1
    %s33 = scalar_select %p30, %s31, %s32
    %p36 = pneg %p30
    %p37 = scmp.eq.s32.totalorder %s9, 1
    %p38 = por %p36, %p37
    %p39 = scmp.ne.s32.totalorder %s31, %s34
    %p40 = scmp.eq.s32.totalorder %s9, 0
    %p41 = por %p39, %p40
    %p42 = scmp.ne.s32.totalorder %s31, %s34
    %p43 = scmp.eq.s32.totalorder %s14, 1
    %p44 = por %p42, %p43
    %p45 = scmp.ne.s32.totalorder %s34, %s35
    %p46 = scmp.eq.s32.totalorder %s14, 0
    %p47 = por %p45, %p46
    %p48 = scmp.ne.s32.totalorder %s34, %s35
    %p49 = scmp.eq.s32.totalorder %s15, 1
    %p50 = por %p48, %p49
    %p52 = scmp.ne.s32.totalorder %s35, %s51
    %p53 = scmp.eq.s32.totalorder %s15, 0
    %p54 = por %p52, %p53
    %s55 = ssub.s32 %s17, %s24
    %p56 = scmp.eq.s32.totalorder %s55, 0
    %s58 = sadd.s32 %s57, 1
    %s59 = scalar_select %p56, %s57, %s58
    %p62 = pneg %p56
    %p63 = scmp.eq.s32.totalorder %s9, 1
    %p64 = por %p62, %p63
    %p65 = scmp.ne.s32.totalorder %s57, %s60
    %p66 = scmp.eq.s32.totalorder %s9, 0
    %p67 = por %p65, %p66
    %p68 = scmp.ne.s32.totalorder %s57, %s60
    %p69 = scmp.eq.s32.totalorder %s14, 1
    %p70 = por %p68, %p69
    %p71 = scmp.ne.s32.totalorder %s60, %s61
    %p72 = scmp.eq.s32.totalorder %s14, 0
    %p73 = por %p71, %p72
    %p74 = scmp.ne.s32.totalorder %s60, %s61
    %p75 = scmp.eq.s32.totalorder %s15, 1
    %p76 = por %p74, %p75
    %p78 = scmp.ne.s32.totalorder %s61, %s77
    %p79 = scmp.eq.s32.totalorder %s15, 0
    %p80 = por %p78, %p79
    %s81 = ssub.s32 %s16, %s28
    %s82 = ssub.s32 %s17, %s24
    %s83 = sor.u32 %s81, %s82
    %p84 = scmp.eq.s32.totalorder %s83, 0
    %s86 = sadd.s32 %s85, 1
    %s87 = scalar_select %p84, %s85, %s86
    %p90 = pneg %p84
    %p91 = scmp.eq.s32.totalorder %s9, 1
    %p92 = por %p90, %p91
    %p93 = scmp.ne.s32.totalorder %s85, %s88
    %p94 = scmp.eq.s32.totalorder %s9, 0
    %p95 = por %p93, %p94
    %p96 = scmp.ne.s32.totalorder %s85, %s88
    %p97 = scmp.eq.s32.totalorder %s14, 1
    %p98 = por %p96, %p97
    %p99 = scmp.ne.s32.totalorder %s88, %s89
    %p100 = scmp.eq.s32.totalorder %s14, 0
    %p101 = por %p99, %p100
    %p102 = scmp.ne.s32.totalorder %s88, %s89
    %p103 = scmp.eq.s32.totalorder %s15, 1
    %p104 = por %p102, %p103
    %p106 = scmp.ne.s32.totalorder %s89, %s105
    %p107 = scmp.eq.s32.totalorder %s15, 0
    %p108 = por %p106, %p107
    %s109 = ssub.s32 %s16, %s28
    %s110 = ssub.s32 %s17, %s24
    %s111 = sor.u32 %s109, %s110
    %p112 = scmp.eq.s32.totalorder %s111, 0
    %s114 = sadd.s32 %s113, 1
    %s115 = scalar_select %p112, %s113, %s114
    %p118 = pneg %p112
    %p119 = scmp.eq.s32.totalorder %s9, 1
    %p120 = por %p118, %p119
    %p121 = scmp.ne.s32.totalorder %s113, %s116
    %p122 = scmp.eq.s32.totalorder %s9, 0
    %p123 = por %p121, %p122
    %p124 = scmp.ne.s32.totalorder %s113, %s116
    %p125 = scmp.eq.s32.totalorder %s14, 1
    %p126 = por %p124, %p125
    %p127 = scmp.ne.s32.totalorder %s116, %s117
    %p128 = scmp.eq.s32.totalorder %s14, 0
    %p129 = por %p127, %p128
    %p130 = scmp.ne.s32.totalorder %s116, %s117
    %p131 = scmp.eq.s32.totalorder %s15, 1
    %p132 = por %p130, %p131
    %p134 = scmp.ne.s32.totalorder %s117, %s133
    %p135 = scmp.eq.s32.totalorder %s15, 0
    %p136 = por %p134, %p135
    %p137 = scmp.le.s32.totalorder 1, %s9
    %p138 = scmp.lt.s32.totalorder %s9, 3
    %p139 = pnand %p137, %p138
    %p140 = pneg %p139
    // Predicated region
    $region9: #{flame_forward.3} parent=5 // pred_check
      _
    $region10: #{flame_forward.3} parent=5 // pred_check_branch
      %142 = sbr.rel (%p139) target = $region12
    $region11: #{flame_forward.3} parent=5 // pred_region
      %s143 = ssub.s32 %s9, 1
      // Predicated region
      $region13: #{flame_forward.3} parent=11 // pred_check
        %p144 = pneg %p73
      $region14: #{flame_forward.3} parent=11 // pred_check_branch
        %146 = sbr.rel (%p144) target = $region16
      $region15: #{flame_forward.3} parent=11 // pred_region
        %s147 = smul.u32 2, %s19
        %p148 = scmp.lt.s32.totalorder %s147, 1
        %s149 = scalar_select %p148, %s147, 1
        %s150 = smul.addr %s149, 8
        %s151 = scalar_lea.vmem %s1, %s150
        %s152 = smul.u32 2, %s19
      $region16: #{flame_forward.3} parent=11 // pred_fallthru
        _
    $region12: #{flame_forward.3} parent=5 // pred_fallthru
      _
    %p153 = scmp.lt.s32.totalorder %s9, 2
    // Predicated region
    $region17: #{flame_forward.3} parent=5 // pred_check
      %p154 = pneg %p153
    $region18: #{flame_forward.3} parent=5 // pred_check_branch
      %156 = sbr.rel (%p154) target = $region20
    $region19: #{flame_forward.3} parent=5 // pred_region
      // Predicated region
      $region21: #{flame_forward.3} parent=19 // pred_check
        %p157 = pneg %p41
      $region22: #{flame_forward.3} parent=19 // pred_check_branch
        %159 = sbr.rel (%p157) target = $region24
      $region23: #{flame_forward.3} parent=19 // pred_region
        %p160 = scmp.lt.s32.totalorder %s16, 1
        %s161 = scalar_select %p160, %s16, 1
        %s162 = smul.addr %s161, 2
        %s163 = smul.addr %s162, 8
        %s164 = scalar_lea.vmem %s0, %s163
      $region24: #{flame_forward.3} parent=19 // pred_fallthru
        _
      // Predicated region
      $region25: #{flame_forward.3} parent=19 // pred_check
        %p165 = pneg %p95
      $region26: #{flame_forward.3} parent=19 // pred_check_branch
        %167 = sbr.rel (%p165) target = $region28
      $region27: #{flame_forward.3} parent=19 // pred_region
        %s168 = smul.u32 2, %s17
        %p169 = scmp.lt.s32.totalorder %s16, 1
        %s170 = scalar_select %p169, %s16, 1
        %p171 = scmp.lt.s32.totalorder %s168, 1
        %s172 = scalar_select %p171, %s168, 1
        %s173 = smul.addr %s170, 2
        %s174 = sadd.s32 %s172, %s173
        %s175 = smul.addr %s174, 4
        %s176 = scalar_lea.vmem %s2, %s175
        %s177 = smul.u32 2, %s17
      $region28: #{flame_forward.3} parent=19 // pred_fallthru
        _
    $region20: #{flame_forward.3} parent=5 // pred_fallthru
      _
    %p178 = scmp.le.s32.totalorder 1, %s9
    %p179 = scmp.lt.s32.totalorder %s9, 3
    %p180 = pnand %p178, %p179
    %p181 = pneg %p180
    // Predicated region
    $region29: #{flame_forward.3} parent=5 // pred_check
      _
    $region30: #{flame_forward.3} parent=5 // pred_check_branch
      %183 = sbr.rel (%p180) target = $region32
    $region31: #{flame_forward.3} parent=5 // pred_region
      %s184 = ssub.s32 %s9, 1
      %p185 = scmp.lt.s32.totalorder %s18, 1
      %s186 = scalar_select %p185, %s18, 1
      %s187 = smul.addr %s186, 2
      %s188 = smul.addr %s187, 8
      %s189 = scalar_lea.vmem %s0, %s188
      %p190 = pneg %p47
      %p191 = pneg %p44
      %s192 = smul.u32 2, %s19
      %p193 = scmp.lt.s32.totalorder %s192, 1
      %s194 = scalar_select %p193, %s192, 1
      %s195 = smul.addr %s194, 8
      %s196 = scalar_lea.vmem %s1, %s195
      %p197 = pneg %p73
      %p198 = pneg %p70
      %s199 = smul.u32 2, %s19
      %p200 = scmp.lt.s32.totalorder %s18, 1
      %s201 = scalar_select %p200, %s18, 1
      %p202 = scmp.lt.s32.totalorder %s199, 1
      %s203 = scalar_select %p202, %s199, 1
      %s204 = smul.addr %s201, 2
      %s205 = sadd.s32 %s203, %s204
      %s206 = smul.addr %s205, 4
      %s207 = scalar_lea.vmem %s2, %s206
      %p208 = pneg %p101
      %p209 = pneg %p98
      %p210 = pneg %p129
      %p211 = pneg %p126
      %s212 = smul.u32 2, %s19
      %p213 = scmp.lt.s32.totalorder %s18, 1
      %s214 = scalar_select %p213, %s18, 1
      %p215 = scmp.lt.s32.totalorder %s212, 1
      %s216 = scalar_select %p215, %s212, 1
      %s217 = smul.addr %s214, 2
      %s218 = sadd.s32 %s216, %s217
      %s219 = smul.addr %s218, 4
      %s220 = scalar_lea.vmem %s3, %s219
      %p221 = scmp.lt.s32.totalorder %s18, 1
      %s222 = scalar_select %p221, %s18, 1
      %s223 = smul.addr %s222, 2
      %s224 = smul.addr %s223, 8
      %s225 = scalar_lea.vmem %s0, %s224
      %s226 = smul.u32 2, %s19
      %p227 = scmp.lt.s32.totalorder %s226, 1
      %s228 = scalar_select %p227, %s226, 1
      %s229 = smul.addr %s228, 8
      %s230 = scalar_lea.vmem %s1, %s229
      %s231 = smul.u32 2, %s19
      %s232 = smul.u32 2, %s19
      %p233 = scmp.lt.s32.totalorder %s18, 1
      %s234 = scalar_select %p233, %s18, 1
      %p235 = scmp.lt.s32.totalorder %s232, 1
      %s236 = scalar_select %p235, %s232, 1
      %s237 = smul.addr %s234, 2
      %s238 = sadd.s32 %s236, %s237
      %s239 = smul.addr %s238, 4
      %s240 = scalar_lea.vmem %s2, %s239
      %s241 = smul.u32 2, %s19
      %s242 = smul.u32 2, %s19
      %p243 = scmp.lt.s32.totalorder %s18, 1
      %s244 = scalar_select %p243, %s18, 1
      %p245 = scmp.lt.s32.totalorder %s242, 1
      %s246 = scalar_select %p245, %s242, 1
      %s247 = smul.addr %s244, 2
      %s248 = sadd.s32 %s246, %s247
      %s249 = smul.addr %s248, 4
      %s250 = scalar_lea.vmem %s3, %s249
      %s251 = smul.u32 2, %s19
      %v252 = vld [vmem:[%s225] sm:$0xff]
      %v253 = vld [vmem:[%s225 + $0x8] sm:$0xf]
      %v254 = vld [vmem:[%s230] sm:$0x1f]
      %v255 = vld [vmem:[%s230 + $0x8] sm:$0x1f]
      %vm256 = vcmask 39936
      %v258 = vsel %vm256, %v252, 0
      %v261 = vsel %vm256, %v253, 0
      %vm263 = vcmask 1044480
      %v265 = vsel %vm263, %v254, 0
      %v268 = vsel %vm263, %v255, 0
      %270 = vmatpush.msra.mxu0 0.0
      %271 = vmatpush.msra.mxu0 0.0
      %272 = vmatpush.msra.mxu0 0.0
      %273 = vmatpush.msra.mxu0 0.0
      %274 = vmatpush.msra.mxu0 0.0
      %275 = vmatpush.msra.mxu0 0.0
      %276 = vmatpush.msra.mxu0 0.0
      %277 = vmatpush.msra.mxu0 0.0
      %278 = vmatpush.msra.mxu0 0.0
      %279 = vmatpush.msra.mxu0 0.0
      %280 = vmatpush.msra.mxu0 0.0
      %281 = vmatpush.msra.mxu0 0.0
      %282 = vmatpush.msra.mxu0 0.0
      %283 = vmatpush.msra.mxu0 0.0
      %284 = vmatpush.msra.mxu0 0.0
      %285 = vmatpush.msra.mxu0 %v265
      %286 = vmatmul.f32.gmra.mxu0 %v258
      %v287 = vpop.f32.mrf.mxu0
      %v288 = vadd.f32 0.0, %v287
      %289 = vmatmul.f32.gmra.mxu0 %v261
      %v290 = vpop.f32.mrf.mxu0
      %v291 = vadd.f32 0.0, %v290
      %292 = vdwg.mxu0
      %293 = vmatpush.msra.mxu0 0.0
      %294 = vmatpush.msra.mxu0 0.0
      %295 = vmatpush.msra.mxu0 0.0
      %296 = vmatpush.msra.mxu0 0.0
      %297 = vmatpush.msra.mxu0 0.0
      %298 = vmatpush.msra.mxu0 0.0
      %299 = vmatpush.msra.mxu0 0.0
      %300 = vmatpush.msra.mxu0 0.0
      %301 = vmatpush.msra.mxu0 0.0
      %302 = vmatpush.msra.mxu0 0.0
      %303 = vmatpush.msra.mxu0 0.0
      %304 = vmatpush.msra.mxu0 0.0
      %305 = vmatpush.msra.mxu0 0.0
      %306 = vmatpush.msra.mxu0 0.0
      %307 = vmatpush.msra.mxu0 0.0
      %308 = vmatpush.msra.mxu0 %v268
      %309 = vmatmul.f32.gmra.mxu0 %v258
      %v310 = vpop.f32.mrf.mxu0
      %v311 = vadd.f32 0.0, %v310
      %312 = vmatmul.f32.gmra.mxu0 %v261
      %v313 = vpop.f32.mrf.mxu0
      %v314 = vadd.f32 0.0, %v313
      %315 = vdwg.mxu0
      %v316 = vld [vmem:[%s240] sm:$0x77]
      %v318 = vperm.slane %v316, 0
      %v319 = vperm.slane %v316, 4
      %v322 = vperm.slane %v318, 0
      %v323 = vperm.slane %v319, 0
      %v324 = vmul.f32 %v288, %v322
      %v325 = vmul.f32 %v311, %v323
      %v326 = vperm.slane %v316, 1
      %v327 = vperm.slane %v316, 5
      %v330 = vperm.slane %v326, 1
      %v331 = vperm.slane %v327, 1
      %v332 = vmul.f32 %v288, %v330
      %v333 = vmul.f32 %v311, %v331
      %v336 = vrot.slane %v332, 3
      %v337 = vrot.slane %v333, 3
      %v340 = vadd.f32 %v324, %v336
      %v341 = vadd.f32 %v325, %v337
      %v342 = vperm.slane %v316, 2
      %v343 = vperm.slane %v316, 6
      %v346 = vperm.slane %v342, 2
      %v347 = vperm.slane %v343, 2
      %v348 = vmul.f32 %v288, %v346
      %v349 = vmul.f32 %v311, %v347
      %v350 = vmul.f32 %v291, %v346
      %v351 = vmul.f32 %v314, %v347
      %vm356 = vcmask 1041408
      %v357 = vrot.slane %v348, 6
      %v358 = vrot.slane %v350, 6
      %v359 = vsel %vm356, %v357, %v358
      %v360 = vrot.slane %v349, 6
      %v361 = vrot.slane %v351, 6
      %v362 = vsel %vm356, %v360, %v361
      %v365 = vadd.f32 %v340, %v359
      %v366 = vadd.f32 %v341, %v362
      %v369 = vrot.slane %v291, 1
      %v370 = vrot.slane %v314, 1
      %v373 = vadd.f32 %v365, %v369
      %v374 = vadd.f32 %v366, %v370
      %v377 = vrot.slane %v374, 4
      %vm378 = vcmask 1043456
      %v379 = vsel %vm378, %v373, %v377
      %381 = vst [vmem:[%s250] sm:$0x77] %v379
      %s382 = smul.u32 2, %s19
      %p383 = scmp.lt.s32.totalorder %s18, 1
      %s384 = scalar_select %p383, %s18, 1
      %p385 = scmp.lt.s32.totalorder %s382, 1
      %s386 = scalar_select %p385, %s382, 1
      %s387 = smul.addr %s384, 2
      %s388 = sadd.s32 %s386, %s387
      %s389 = smul.addr %s388, 4
      %s390 = scalar_lea.vmem %s3, %s389
      // Predicated region
      $region33: #{flame_forward.3} parent=31 // pred_check
        %p391 = pneg %p126
      $region34: #{flame_forward.3} parent=31 // pred_check_branch
        %393 = sbr.rel (%p391) target = $region36
      $region35: #{flame_forward.3} parent=31 // pred_region
        %s394 = smul.u32 2, %s19
      $region36: #{flame_forward.3} parent=31 // pred_fallthru
        _
    $region32: #{flame_forward.3} parent=5 // pred_fallthru
      _
    %p395 = scmp.le.s32.totalorder 2, %s9
    // Predicated region
    $region37: #{flame_forward.3} parent=5 // pred_check
      %p396 = pneg %p395
    $region38: #{flame_forward.3} parent=5 // pred_check_branch
      %398 = sbr.rel (%p396) target = $region40
    $region39: #{flame_forward.3} parent=5 // pred_region
      %s399 = ssub.s32 %s9, 2
      // Predicated region
      $region41: #{flame_forward.3} parent=39 // pred_check
        %p400 = pneg %p132
      $region42: #{flame_forward.3} parent=39 // pred_check_branch
        %402 = sbr.rel (%p400) target = $region44
      $region43: #{flame_forward.3} parent=39 // pred_region
        %s403 = smul.u32 2, %s21
        %p404 = scmp.lt.s32.totalorder %s20, 1
        %s405 = scalar_select %p404, %s20, 1
        %p406 = scmp.lt.s32.totalorder %s403, 1
        %s407 = scalar_select %p406, %s403, 1
        %s408 = smul.addr %s405, 2
        %s409 = sadd.s32 %s407, %s408
        %s410 = smul.addr %s409, 4
        %s411 = scalar_lea.vmem %s3, %s410
      $region44: #{flame_forward.3} parent=39 // pred_fallthru
        _
    $region40: #{flame_forward.3} parent=5 // pred_fallthru
      _
  $region6: #{flame_forward.3} parent=0 // loop_footer
    %s13 = sadd.s32 1, %s9
  $region7: #{flame_forward.3} parent=0 // loop_footer_branch
    %8 = sbr.rel target = $region3
  $region8: #{flame_forward.3} parent=0 // loop_exit
    _

</llo_original>
